<compile_context>
chip_gen: v6e
topology: v6e:2x2x1
jax: 0.10.0
libtpu: 0.0.40
codegen_flags: <defaults>
</compile_context>

<pallas_src>
import functools

import jax
import jax.numpy as jnp
from jax.experimental import pallas as pl
from jax.experimental.pallas import tpu as pltpu

_LANE = 128


def _cdiv(a, b):
    return -(-a // b)


def _policy_kernel(xT_ref,
                   w1_ref, b1_ref,
                   w2_ref, b2_ref,
                   wmu_ref, bmu_ref,
                   wstd_ref, bstd_ref,
                   muT_ref, stdT_ref,
                   *, max_action):
    xT = xT_ref[...]                                                   # [S, TB]

    # fc1 + ReLU   (batch on lanes -> lane-dense elementwise ops)
    h1 = jnp.dot(w1_ref[...], xT, preferred_element_type=jnp.float32)
    h1 = jnp.maximum(h1 + b1_ref[...], 0.0)                           # [H, TB]

    # fc2 + ReLU
    h2 = jnp.dot(w2_ref[...], h1, preferred_element_type=jnp.float32)
    h2 = jnp.maximum(h2 + b2_ref[...], 0.0)                           # [H1, TB]

    # mu head: max_action * tanh(.)
    mu = jnp.dot(wmu_ref[...], h2, preferred_element_type=jnp.float32)
    muT_ref[...] = max_action * jnp.tanh(mu + bmu_ref[...])           # [A, TB]

    # std head: max(softplus(.), 1e-6)   (stable softplus via logaddexp)
    st = jnp.dot(wstd_ref[...], h2, preferred_element_type=jnp.float32)
    stdT_ref[...] = jnp.maximum(jnp.logaddexp(st + bstd_ref[...], 0.0), 1e-6)


def _choose_tiling(B, block_b):
    """Pick (tile_b, padded_B, n_tiles): tile a multiple of 128 lanes, minimal
    padding, and >= 2 grid steps when the batch allows it (v7x megacore)."""
    nblk = _cdiv(B, _LANE)                       # 128-row lane blocks needed
    blk_per_tile = max(1, min(nblk, max(1, block_b // _LANE)))
    n_tiles = _cdiv(nblk, blk_per_tile)
    if n_tiles < 2 and nblk >= 2:
        blk_per_tile = _cdiv(nblk, 2)
        n_tiles = _cdiv(nblk, blk_per_tile)
    tb = blk_per_tile * _LANE
    return tb, n_tiles * tb, n_tiles


def policy_net_continuous(x, params, max_action, *, block_b=512):
    """Runs the fused PPO policy-head kernel.

    x:      [B, state_dim] float32
    params: dict with torch-layout linears:
            w1 [H, S],  b1 [H],  w2 [H1, H],  b2 [H1],
            w_mu [A, H1], b_mu [A], w_std [A, H1], b_std [A]
    returns (mu [B, A], std [B, A])
    """
    B, S = x.shape
    H = params["w1"].shape[0]
    H1 = params["w2"].shape[0]
    A = params["w_mu"].shape[0]

    tb, Bp, n_tiles = _choose_tiling(B, block_b)

    # Present the batch on the lane axis: x^T [S, Bp]  (layout plumbing only).
    xT = x.T
    if Bp != B:
        xT = jnp.pad(xT, ((0, 0), (0, Bp - B)))

    b1 = params["b1"].reshape(H, 1)
    b2 = params["b2"].reshape(H1, 1)
    bmu = params["b_mu"].reshape(A, 1)
    bstd = params["b_std"].reshape(A, 1)

    kernel = functools.partial(_policy_kernel, max_action=float(max_action))

    flops = 2 * Bp * (S * H + H * H1 + 2 * H1 * A)
    transcendentals = 2 * Bp * A                       # tanh + exp(softplus)
    bytes_accessed = 4 * (Bp * S + H * S + H + H1 * H + H1
                          + 2 * (A * H1 + A) + 2 * Bp * A)

    const = lambda i: (0, 0)      # weights/biases stay VMEM-resident
    muT, stdT = pl.pallas_call(
        kernel,
        out_shape=(jax.ShapeDtypeStruct((A, Bp), jnp.float32),
                   jax.ShapeDtypeStruct((A, Bp), jnp.float32)),
        grid=(n_tiles,),
        in_specs=[
            pl.BlockSpec((S, tb), lambda i: (0, i)),   # x^T batch tile
            pl.BlockSpec((H, S), const),               # w1
            pl.BlockSpec((H, 1), const),               # b1
            pl.BlockSpec((H1, H), const),              # w2
            pl.BlockSpec((H1, 1), const),              # b2
            pl.BlockSpec((A, H1), const),              # w_mu
            pl.BlockSpec((A, 1), const),               # b_mu
            pl.BlockSpec((A, H1), const),              # w_std
            pl.BlockSpec((A, 1), const),               # b_std
        ],
        out_specs=(pl.BlockSpec((A, tb), lambda i: (0, i)),
                   pl.BlockSpec((A, tb), lambda i: (0, i))),
        compiler_params=pltpu.CompilerParams(
            dimension_semantics=("parallel",)),
        cost_estimate=pl.CostEstimate(
            flops=flops,
            transcendentals=transcendentals,
            bytes_accessed=bytes_accessed),
    )(
        xT,
        params["w1"], b1,
        params["w2"], b2,
        params["w_mu"], bmu,
        params["w_std"], bstd,
    )

    mu = muT[:, :B].T
    std = stdT[:, :B].T
    return mu, std


def init_params(key, state_dim, hidden_dim, hidden_dim1, action_dim):
    """Deterministic synthetic init, torch nn.Linear layout W [out, in], b [out]."""
    ks = jax.random.split(key, 8)

    def lin(kw, kb, fan_in, fan_out):
        bound = 1.0 / jnp.sqrt(fan_in)
        w = jax.random.uniform(kw, (fan_out, fan_in), jnp.float32, -bound, bound)
        b = jax.random.uniform(kb, (fan_out,), jnp.float32, -bound, bound)
        return w, b

    w1, b1 = lin(ks[0], ks[1], state_dim, hidden_dim)
    w2, b2 = lin(ks[2], ks[3], hidden_dim, hidden_dim1)
    wmu, bmu = lin(ks[4], ks[5], hidden_dim1, action_dim)
    wstd, bstd = lin(ks[6], ks[7], hidden_dim1, action_dim)
    return {
        "w1": w1, "b1": b1,
        "w2": w2, "b2": b2,
        "w_mu": wmu, "b_mu": bmu,
        "w_std": wstd, "b_std": bstd,
    }


def _reference(x, p, max_action):
    x1 = jax.nn.relu(x @ p["w1"].T + p["b1"])
    x2 = jax.nn.relu(x1 @ p["w2"].T + p["b2"])
    mu = max_action * jnp.tanh(x2 @ p["w_mu"].T + p["b_mu"])
    std = jnp.maximum(jax.nn.softplus(x2 @ p["w_std"].T + p["b_std"]), 1e-6)
    return mu, std


if __name__ == "__main__":
    key = jax.random.PRNGKey(0)
    k_x, k_p = jax.random.split(key)

    batch = 2
    state_dim = 8
    hidden_dim = 32
    hidden_dim1 = 32
    action_dim = 4
    max_action = 2.0

    x = jax.random.normal(k_x, (batch, state_dim), dtype=jnp.float32)
    params = init_params(k_p, state_dim, hidden_dim, hidden_dim1, action_dim)

    mu, std = policy_net_continuous(x, params, max_action)
    jax.block_until_ready((mu, std))

    mu_ref, std_ref = _reference(x, params, max_action)
    assert mu.shape == (batch, action_dim) and std.shape == (batch, action_dim)
    assert jnp.allclose(mu, mu_ref, atol=1e-5, rtol=1e-5)
    assert jnp.allclose(std, std_ref, atol=1e-5, rtol=1e-5)
    assert bool(jnp.all(std >= 1e-6))

    print("KERNEL_OK")
</pallas_src>

<mosaic_0001>
module attributes {stable_mosaic.version = 11 : i64} {
  func.func @_policy_kernel(%arg0: i32, %arg1: memref<8x128xf32, #tpu.memory_space<vmem>>, %arg2: memref<32x8xf32, #tpu.memory_space<vmem>>, %arg3: memref<32x1xf32, #tpu.memory_space<vmem>>, %arg4: memref<32x32xf32, #tpu.memory_space<vmem>>, %arg5: memref<32x1xf32, #tpu.memory_space<vmem>>, %arg6: memref<4x32xf32, #tpu.memory_space<vmem>>, %arg7: memref<4x1xf32, #tpu.memory_space<vmem>>, %arg8: memref<4x32xf32, #tpu.memory_space<vmem>>, %arg9: memref<4x1xf32, #tpu.memory_space<vmem>>, %arg10: memref<4x128xf32, #tpu.memory_space<vmem>>, %arg11: memref<4x128xf32, #tpu.memory_space<vmem>>) attributes {dimension_semantics = [#tpu.dimension_semantics<parallel>], iteration_bounds = array<i64: 1>, scalar_prefetch = 0 : i64, scratch_operands = 0 : i64, tpu.core_type = #tpu.core_type<tc>, window_params = [{transform_indices = @transform_0, window_bounds = array<i64: 8, 128>}, {pipeline_mode = #tpu.pipeline_mode<synchronous>, transform_indices = @transform_1, window_bounds = array<i64: 32, 8>}, {pipeline_mode = #tpu.pipeline_mode<synchronous>, transform_indices = @transform_2, window_bounds = array<i64: 32, 1>}, {pipeline_mode = #tpu.pipeline_mode<synchronous>, transform_indices = @transform_3, window_bounds = array<i64: 32, 32>}, {pipeline_mode = #tpu.pipeline_mode<synchronous>, transform_indices = @transform_4, window_bounds = array<i64: 32, 1>}, {pipeline_mode = #tpu.pipeline_mode<synchronous>, transform_indices = @transform_5, window_bounds = array<i64: 4, 32>}, {pipeline_mode = #tpu.pipeline_mode<synchronous>, transform_indices = @transform_6, window_bounds = array<i64: 4, 1>}, {pipeline_mode = #tpu.pipeline_mode<synchronous>, transform_indices = @transform_7, window_bounds = array<i64: 4, 32>}, {pipeline_mode = #tpu.pipeline_mode<synchronous>, transform_indices = @transform_8, window_bounds = array<i64: 4, 1>}, {transform_indices = @transform_9, window_bounds = array<i64: 4, 128>}, {transform_indices = @transform_10, window_bounds = array<i64: 4, 128>}]} {
    %c0 = arith.constant 0 : index
    %c0_0 = arith.constant 0 : index
    %0 = vector.load %arg1[%c0, %c0_0] : memref<8x128xf32, #tpu.memory_space<vmem>>, vector<8x128xf32>
    %c0_1 = arith.constant 0 : index
    %c0_2 = arith.constant 0 : index
    %1 = vector.load %arg2[%c0_1, %c0_2] : memref<32x8xf32, #tpu.memory_space<vmem>>, vector<32x8xf32>
    %cst = arith.constant dense<0.000000e+00> : vector<32x128xf32>
    %2 = tpu.matmul %1, %0, %cst {dimension_numbers = #tpu.dot_dimension_numbers<[1], [0], [0], [1], [0, 0, 1, 1], [], []>} : vector<32x8xf32>, vector<8x128xf32>, vector<32x128xf32> -> vector<32x128xf32>
    %c0_3 = arith.constant 0 : index
    %c0_4 = arith.constant 0 : index
    %3 = vector.load %arg3[%c0_3, %c0_4] : memref<32x1xf32, #tpu.memory_space<vmem>>, vector<32x1xf32>
    %4 = vector.broadcast %3 : vector<32x1xf32> to vector<32x128xf32>
    %5 = arith.addf %2, %4 : vector<32x128xf32>
    %cst_5 = arith.constant 0.000000e+00 : f32
    %6 = vector.broadcast %cst_5 : f32 to vector<32x128xf32>
    %7 = arith.maximumf %5, %6 : vector<32x128xf32>
    %c0_6 = arith.constant 0 : index
    %c0_7 = arith.constant 0 : index
    %8 = vector.load %arg4[%c0_6, %c0_7] : memref<32x32xf32, #tpu.memory_space<vmem>>, vector<32x32xf32>
    %cst_8 = arith.constant dense<0.000000e+00> : vector<32x128xf32>
    %9 = tpu.matmul %8, %7, %cst_8 {dimension_numbers = #tpu.dot_dimension_numbers<[1], [0], [0], [1], [0, 0, 1, 1], [], []>} : vector<32x32xf32>, vector<32x128xf32>, vector<32x128xf32> -> vector<32x128xf32>
    %c0_9 = arith.constant 0 : index
    %c0_10 = arith.constant 0 : index
    %10 = vector.load %arg5[%c0_9, %c0_10] : memref<32x1xf32, #tpu.memory_space<vmem>>, vector<32x1xf32>
    %11 = vector.broadcast %10 : vector<32x1xf32> to vector<32x128xf32>
    %12 = arith.addf %9, %11 : vector<32x128xf32>
    %cst_11 = arith.constant 0.000000e+00 : f32
    %13 = vector.broadcast %cst_11 : f32 to vector<32x128xf32>
    %14 = arith.maximumf %12, %13 : vector<32x128xf32>
    %c0_12 = arith.constant 0 : index
    %c0_13 = arith.constant 0 : index
    %15 = vector.load %arg6[%c0_12, %c0_13] : memref<4x32xf32, #tpu.memory_space<vmem>>, vector<4x32xf32>
    %cst_14 = arith.constant dense<0.000000e+00> : vector<4x128xf32>
    %16 = tpu.matmul %15, %14, %cst_14 {dimension_numbers = #tpu.dot_dimension_numbers<[1], [0], [0], [1], [0, 0, 1, 1], [], []>} : vector<4x32xf32>, vector<32x128xf32>, vector<4x128xf32> -> vector<4x128xf32>
    %c0_15 = arith.constant 0 : index
    %c0_16 = arith.constant 0 : index
    %17 = vector.load %arg7[%c0_15, %c0_16] : memref<4x1xf32, #tpu.memory_space<vmem>>, vector<4x1xf32>
    %18 = vector.broadcast %17 : vector<4x1xf32> to vector<4x128xf32>
    %19 = arith.addf %16, %18 : vector<4x128xf32>
    %20 = math.tanh %19 : vector<4x128xf32>
    %cst_17 = arith.constant 2.000000e+00 : f32
    %21 = vector.broadcast %cst_17 : f32 to vector<4x128xf32>
    %22 = arith.mulf %21, %20 : vector<4x128xf32>
    %c0_18 = arith.constant 0 : index
    %c0_19 = arith.constant 0 : index
    %23 = vector.load %arg10[%c0_18, %c0_19] : memref<4x128xf32, #tpu.memory_space<vmem>>, vector<4x128xf32>
    tpu.vector_store %arg10[%c0_18, %c0_19], %22 {strides = array<i32>} : memref<4x128xf32, #tpu.memory_space<vmem>>, vector<4x128xf32>,
    %c0_20 = arith.constant 0 : index
    %c0_21 = arith.constant 0 : index
    %24 = vector.load %arg8[%c0_20, %c0_21] : memref<4x32xf32, #tpu.memory_space<vmem>>, vector<4x32xf32>
    %cst_22 = arith.constant dense<0.000000e+00> : vector<4x128xf32>
    %25 = tpu.matmul %24, %14, %cst_22 {dimension_numbers = #tpu.dot_dimension_numbers<[1], [0], [0], [1], [0, 0, 1, 1], [], []>} : vector<4x32xf32>, vector<32x128xf32>, vector<4x128xf32> -> vector<4x128xf32>
    %c0_23 = arith.constant 0 : index
    %c0_24 = arith.constant 0 : index
    %26 = vector.load %arg9[%c0_23, %c0_24] : memref<4x1xf32, #tpu.memory_space<vmem>>, vector<4x1xf32>
    %27 = vector.broadcast %26 : vector<4x1xf32> to vector<4x128xf32>
    %28 = arith.addf %25, %27 : vector<4x128xf32>
    %cst_25 = arith.constant 0.000000e+00 : f32
    %29 = vector.broadcast %cst_25 : f32 to vector<4x128xf32>
    %30 = arith.maximumf %28, %29 : vector<4x128xf32>
    %31 = vector.broadcast %cst_25 : f32 to vector<4x128xf32>
    %32 = arith.subf %28, %31 : vector<4x128xf32>
    %33 = arith.cmpf one, %32, %32 : vector<4x128xf32>
    %34 = vector.broadcast %cst_25 : f32 to vector<4x128xf32>
    %35 = arith.addf %28, %34 : vector<4x128xf32>
    %36 = math.absf %32 : vector<4x128xf32>
    %cst_26 = arith.constant 0.000000e+00 : f32
    %37 = vector.broadcast %cst_26 : f32 to vector<4x128xf32>
    %38 = arith.subf %37, %36 : vector<4x128xf32>
    %39 = math.exp %38 : vector<4x128xf32>
    %40 = math.log1p %39 : vector<4x128xf32>
    %41 = arith.addf %30, %40 : vector<4x128xf32>
    %42 = arith.select %33, %35, %41 : vector<4x128xi1>, vector<4x128xf32>
    %cst_27 = arith.constant 9.99999997E-7 : f32
    %43 = vector.broadcast %cst_27 : f32 to vector<4x128xf32>
    %44 = arith.maximumf %42, %43 : vector<4x128xf32>
    %c0_28 = arith.constant 0 : index
    %c0_29 = arith.constant 0 : index
    %45 = vector.load %arg11[%c0_28, %c0_29] : memref<4x128xf32, #tpu.memory_space<vmem>>, vector<4x128xf32>
    tpu.vector_store %arg11[%c0_28, %c0_29], %44 {strides = array<i32>} : memref<4x128xf32, #tpu.memory_space<vmem>>, vector<4x128xf32>,
    return
  }
  func.func @transform_0(%arg0: i32) -> (i32, i32) {
    %c0_i32 = arith.constant 0 : i32
    %c0_i32_0 = arith.constant 0 : i32
    return %c0_i32, %arg0 : i32, i32
  }
  func.func @transform_1(%arg0: i32) -> (i32, i32) {
    %c0_i32 = arith.constant 0 : i32
    %c0_i32_0 = arith.constant 0 : i32
    %c0_i32_1 = arith.constant 0 : i32
    return %c0_i32, %c0_i32_0 : i32, i32
  }
  func.func @transform_2(%arg0: i32) -> (i32, i32) {
    %c0_i32 = arith.constant 0 : i32
    %c0_i32_0 = arith.constant 0 : i32
    %c0_i32_1 = arith.constant 0 : i32
    return %c0_i32, %c0_i32_0 : i32, i32
  }
  func.func @transform_3(%arg0: i32) -> (i32, i32) {
    %c0_i32 = arith.constant 0 : i32
    %c0_i32_0 = arith.constant 0 : i32
    %c0_i32_1 = arith.constant 0 : i32
    return %c0_i32, %c0_i32_0 : i32, i32
  }
  func.func @transform_4(%arg0: i32) -> (i32, i32) {
    %c0_i32 = arith.constant 0 : i32
    %c0_i32_0 = arith.constant 0 : i32
    %c0_i32_1 = arith.constant 0 : i32
    return %c0_i32, %c0_i32_0 : i32, i32
  }
  func.func @transform_5(%arg0: i32) -> (i32, i32) {
    %c0_i32 = arith.constant 0 : i32
    %c0_i32_0 = arith.constant 0 : i32
    %c0_i32_1 = arith.constant 0 : i32
    return %c0_i32, %c0_i32_0 : i32, i32
  }
  func.func @transform_6(%arg0: i32) -> (i32, i32) {
    %c0_i32 = arith.constant 0 : i32
    %c0_i32_0 = arith.constant 0 : i32
    %c0_i32_1 = arith.constant 0 : i32
    return %c0_i32, %c0_i32_0 : i32, i32
  }
  func.func @transform_7(%arg0: i32) -> (i32, i32) {
    %c0_i32 = arith.constant 0 : i32
    %c0_i32_0 = arith.constant 0 : i32
    %c0_i32_1 = arith.constant 0 : i32
    return %c0_i32, %c0_i32_0 : i32, i32
  }
  func.func @transform_8(%arg0: i32) -> (i32, i32) {
    %c0_i32 = arith.constant 0 : i32
    %c0_i32_0 = arith.constant 0 : i32
    %c0_i32_1 = arith.constant 0 : i32
    return %c0_i32, %c0_i32_0 : i32, i32
  }
  func.func @transform_9(%arg0: i32) -> (i32, i32) {
    %c0_i32 = arith.constant 0 : i32
    %c0_i32_0 = arith.constant 0 : i32
    return %c0_i32, %arg0 : i32, i32
  }
  func.func @transform_10(%arg0: i32) -> (i32, i32) {
    %c0_i32 = arith.constant 0 : i32
    %c0_i32_0 = arith.constant 0 : i32
    return %c0_i32, %arg0 : i32, i32
  }
}

</mosaic_0001>

<llo_original>
// kernel: tpu_custom_call.1
$region0: #{tpu_custom_call.1}
  #allocation0 [shape = 'u32[]', space=smem, size = 0x4, offset = 0x4, fixed_abs, tag = 'smem constant byte address 0x4 - core index']
  #allocation1 [shape = 'u32[144,128]{1,0:T(1,128)}', space=vmem, size = 0x12000, scoped, tag = 'internal scratch']
  %s0 = inlined_call_operand.vmem [shape: f32[8,128], index: 0, kind: input, shape index: {}]
  %s1 = inlined_call_operand.vmem [shape: f32[32,8], index: 1, kind: input, shape index: {}]
  %s2 = inlined_call_operand.vmem [shape: f32[32,1], index: 2, kind: input, shape index: {}]
  %s3 = inlined_call_operand.vmem [shape: f32[32,32], index: 3, kind: input, shape index: {}]
  %s4 = inlined_call_operand.vmem [shape: f32[32,1], index: 4, kind: input, shape index: {}]
  %s5 = inlined_call_operand.vmem [shape: f32[4,32], index: 5, kind: input, shape index: {}]
  %s6 = inlined_call_operand.vmem [shape: f32[4,1], index: 6, kind: input, shape index: {}]
  %s7 = inlined_call_operand.vmem [shape: f32[4,32], index: 7, kind: input, shape index: {}]
  %s8 = inlined_call_operand.vmem [shape: f32[4,1], index: 8, kind: input, shape index: {}]
  %s9 = inlined_call_operand.hbm [shape: f32[4,128], index: 9, kind: output, shape index: {0}]
  %s10 = inlined_call_operand.hbm [shape: f32[4,128], index: 10, kind: output, shape index: {1}]
  %11 = xla_tuple %s9, %s10
  %s12 = sld [smem:[#allocation0]]
  $region54: #{tpu_custom_call.1} parent=0
    _
  %s14 = ssub.s32 1, %s12
  %s15 = scalar_select 0, %s14, %s12
  $region1: #{tpu_custom_call.1} parent=0
    #allocation2 [shape = 'u8[2048]{0}', space=vmem, size = 0x800, scoped, tag = 'output window, operand 0, single buffered']
    #allocation3 [shape = 's32[1]{0}', space=sflag, size = 0x4, scoped, tag = 'scoped memory for tpu_custom_call.1']
    #allocation4 [shape = 'u8[2048]{0}', space=vmem, size = 0x800, scoped, tag = 'output window, operand 1, single buffered']
    #allocation5 [shape = 's32[1]{0}', space=sflag, size = 0x4, scoped, tag = 'scoped memory for tpu_custom_call.1']
    %16 = vsyncpa [#allocation3], 0
    %17 = vsyncpa [#allocation5], 0
    // Predicated region
    $region2: #{tpu_custom_call.1} parent=1 // pred_check
      _
    $region3: #{tpu_custom_call.1} parent=1 // pred_check_branch
      %19 = sbr.rel (0) target = $region5
    $region4: #{tpu_custom_call.1} parent=1 // pred_region
      _
    $region5: #{tpu_custom_call.1} parent=1 // pred_fallthru
      _
    // Predicated region
    $region6: #{tpu_custom_call.1} parent=1 // pred_check
      _
    $region7: #{tpu_custom_call.1} parent=1 // pred_check_branch
      %21 = sbr.rel (0) target = $region9
    $region8: #{tpu_custom_call.1} parent=1 // pred_region
      _
    $region9: #{tpu_custom_call.1} parent=1 // pred_fallthru
      _
    // Predicated region
    $region10: #{tpu_custom_call.1} parent=1 // pred_check
      _
    $region11: #{tpu_custom_call.1} parent=1 // pred_check_branch
      %23 = sbr.rel (0) target = $region13
    $region12: #{tpu_custom_call.1} parent=1 // pred_region
      _
    $region13: #{tpu_custom_call.1} parent=1 // pred_fallthru
      _
    // Predicated region
    $region14: #{tpu_custom_call.1} parent=1 // pred_check
      _
    $region15: #{tpu_custom_call.1} parent=1 // pred_check_branch
      %25 = sbr.rel (0) target = $region17
    $region16: #{tpu_custom_call.1} parent=1 // pred_region
      _
    $region17: #{tpu_custom_call.1} parent=1 // pred_fallthru
      _
    // Predicated region
    $region18: #{tpu_custom_call.1} parent=1 // pred_check
      _
    $region19: #{tpu_custom_call.1} parent=1 // pred_check_branch
      %27 = sbr.rel (0) target = $region21
    $region20: #{tpu_custom_call.1} parent=1 // pred_region
      _
    $region21: #{tpu_custom_call.1} parent=1 // pred_fallthru
      _
    // Predicated region
    $region22: #{tpu_custom_call.1} parent=1 // pred_check
      _
    $region23: #{tpu_custom_call.1} parent=1 // pred_check_branch
      %29 = sbr.rel (0) target = $region25
    $region24: #{tpu_custom_call.1} parent=1 // pred_region
      _
    $region25: #{tpu_custom_call.1} parent=1 // pred_fallthru
      _
    // Predicated region
    $region26: #{tpu_custom_call.1} parent=1 // pred_check
      _
    $region27: #{tpu_custom_call.1} parent=1 // pred_check_branch
      %31 = sbr.rel (0) target = $region29
    $region28: #{tpu_custom_call.1} parent=1 // pred_region
      _
    $region29: #{tpu_custom_call.1} parent=1 // pred_fallthru
      _
    // Predicated region
    $region30: #{tpu_custom_call.1} parent=1 // pred_check
      _
    $region31: #{tpu_custom_call.1} parent=1 // pred_check_branch
      %33 = sbr.rel (0) target = $region33
    $region32: #{tpu_custom_call.1} parent=1 // pred_region
      _
    $region33: #{tpu_custom_call.1} parent=1 // pred_fallthru
      _
    // Predicated region
    $region34: #{tpu_custom_call.1} parent=1 // pred_check
      _
    $region35: #{tpu_custom_call.1} parent=1 // pred_check_branch
      %35 = sbr.rel (0) target = $region37
    $region36: #{tpu_custom_call.1} parent=1 // pred_region
      _
    $region37: #{tpu_custom_call.1} parent=1 // pred_fallthru
      _
    %v36 = vld [vmem:[%s0] sm:$0xff]
    %v37 = vld [vmem:[%s1] sm:$0xff]
    %v38 = vld [vmem:[%s1 + $0x8] sm:$0xff]
    %v39 = vld [vmem:[%s1 + $0x10] sm:$0xff]
    %v40 = vld [vmem:[%s1 + $0x18] sm:$0xff]
    %v41 = vld [vmem:[%s2] sm:$0xff]
    %v42 = vld [vmem:[%s2 + $0x8] sm:$0xff]
    %v43 = vld [vmem:[%s2 + $0x10] sm:$0xff]
    %v44 = vld [vmem:[%s2 + $0x18] sm:$0xff]
    %46 = vset.pattern.permute.xlu0 0
    %47 = vperm.xlu0 %46, %v41
    %v48 = vpop.permute.xlu0 %47
    %51 = vset.pattern.permute.xlu0 0
    %52 = vperm.xlu0 %51, %v42
    %v53 = vpop.permute.xlu0 %52
    %56 = vset.pattern.permute.xlu0 0
    %57 = vperm.xlu0 %56, %v43
    %v58 = vpop.permute.xlu0 %57
    %61 = vset.pattern.permute.xlu0 0
    %62 = vperm.xlu0 %61, %v44
    %v63 = vpop.permute.xlu0 %62
    %vm65 = vcmask 64512
    %v67 = vsel %vm65, %v37, 0
    %v70 = vsel %vm65, %v38, 0
    %v73 = vsel %vm65, %v39, 0
    %v76 = vsel %vm65, %v40, 0
    %78 = vmatprep.subr.mxu0 0.0
    %79 = vmatpush1.msra.mxu0 0.0
    %80 = vmatprep.subr.mxu0 0.0
    %81 = vmatpush1.msra.mxu0 0.0
    %82 = vmatprep.subr.mxu0 0.0
    %83 = vmatpush1.msra.mxu0 0.0
    %84 = vmatprep.subr.mxu0 0.0
    %85 = vmatpush1.msra.mxu0 0.0
    %86 = vmatprep.subr.mxu0 0.0
    %87 = vmatpush1.msra.mxu0 0.0
    %88 = vmatprep.subr.mxu0 0.0
    %89 = vmatpush1.msra.mxu0 0.0
    %90 = vmatprep.subr.mxu0 0.0
    %91 = vmatpush1.msra.mxu0 0.0
    %92 = vmatprep.subr.mxu0 0.0
    %93 = vmatpush1.msra.mxu0 0.0
    %94 = vmatprep.subr.mxu0 0.0
    %95 = vmatpush1.msra.mxu0 0.0
    %96 = vmatprep.subr.mxu0 0.0
    %97 = vmatpush1.msra.mxu0 0.0
    %98 = vmatprep.subr.mxu0 0.0
    %99 = vmatpush1.msra.mxu0 0.0
    %100 = vmatprep.subr.mxu0 0.0
    %101 = vmatpush1.msra.mxu0 0.0
    %102 = vmatprep.subr.mxu0 0.0
    %103 = vmatpush1.msra.mxu0 0.0
    %104 = vmatprep.subr.mxu0 0.0
    %105 = vmatpush1.msra.mxu0 0.0
    %106 = vmatprep.subr.mxu0 0.0
    %107 = vmatpush1.msra.mxu0 0.0
    %108 = vmatprep.subr.mxu0 0.0
    %109 = vmatpush1.msra.mxu0 %v36
    %110 = vmatprep.subr.mxu0 0.0
    %111 = vmatpush2.msra.mxu0 0.0
    %112 = vmatprep.subr.mxu0 0.0
    %113 = vmatpush2.msra.mxu0 0.0
    %114 = vmatprep.subr.mxu0 0.0
    %115 = vmatpush2.msra.mxu0 0.0
    %116 = vmatprep.subr.mxu0 0.0
    %117 = vmatpush2.msra.mxu0 0.0
    %118 = vmatprep.subr.mxu0 0.0
    %119 = vmatpush2.msra.mxu0 0.0
    %120 = vmatprep.subr.mxu0 0.0
    %121 = vmatpush2.msra.mxu0 0.0
    %122 = vmatprep.subr.mxu0 0.0
    %123 = vmatpush2.msra.mxu0 0.0
    %124 = vmatprep.subr.mxu0 0.0
    %125 = vmatpush2.msra.mxu0 0.0
    %126 = vmatprep.subr.mxu0 0.0
    %127 = vmatpush2.msra.mxu0 0.0
    %128 = vmatprep.subr.mxu0 0.0
    %129 = vmatpush2.msra.mxu0 0.0
    %130 = vmatprep.subr.mxu0 0.0
    %131 = vmatpush2.msra.mxu0 0.0
    %132 = vmatprep.subr.mxu0 0.0
    %133 = vmatpush2.msra.mxu0 0.0
    %134 = vmatprep.subr.mxu0 0.0
    %135 = vmatpush2.msra.mxu0 0.0
    %136 = vmatprep.subr.mxu0 0.0
    %137 = vmatpush2.msra.mxu0 0.0
    %138 = vmatprep.subr.mxu0 0.0
    %139 = vmatpush2.msra.mxu0 0.0
    %140 = vmatprep.subr.mxu0 0.0
    %141 = vmatpush2.msra.mxu0 0.0
    %142 = vmatprep.mubr.f32.mxu0 0.0
    %143 = vmatmul.mubr.f32.gmra.mxu0 %v67
    %v144 = vpop.f32.mrf.mxu0
    %v145 = vadd.f32 %v48, %v144
    %v146 = vpop.f32.mrf.mxu0
    %147 = vmatprep.mubr.f32.mxu0 0.0
    %148 = vmatmul.mubr.f32.gmra.mxu0 %v70
    %v149 = vpop.f32.mrf.mxu0
    %v150 = vadd.f32 %v53, %v149
    %v151 = vpop.f32.mrf.mxu0
    %152 = vmatprep.mubr.f32.mxu0 0.0
    %153 = vmatmul.mubr.f32.gmra.mxu0 %v73
    %v154 = vpop.f32.mrf.mxu0
    %v155 = vadd.f32 %v58, %v154
    %v156 = vpop.f32.mrf.mxu0
    %157 = vmatprep.mubr.f32.mxu0 0.0
    %158 = vmatmul.mubr.f32.gmra.mxu0 %v76
    %v159 = vpop.f32.mrf.mxu0
    %v160 = vadd.f32 %v63, %v159
    %v161 = vpop.f32.mrf.mxu0
    %162 = vdwg.mxu0
    %v163 = vmax.f32 %v145, 0.0
    %v164 = vmax.f32 %v150, 0.0
    %v165 = vmax.f32 %v155, 0.0
    %v166 = vmax.f32 %v160, 0.0
    %v167 = vld [vmem:[%s3] sm:$0xff]
    %v168 = vld [vmem:[%s3 + $0x8] sm:$0xff]
    %v169 = vld [vmem:[%s3 + $0x10] sm:$0xff]
    %v170 = vld [vmem:[%s3 + $0x18] sm:$0xff]
    %v171 = vld [vmem:[%s4] sm:$0xff]
    %v172 = vld [vmem:[%s4 + $0x8] sm:$0xff]
    %v173 = vld [vmem:[%s4 + $0x10] sm:$0xff]
    %v174 = vld [vmem:[%s4 + $0x18] sm:$0xff]
    %176 = vset.pattern.permute.xlu0 0
    %177 = vperm.xlu0 %176, %v171
    %v178 = vpop.permute.xlu0 %177
    %181 = vset.pattern.permute.xlu0 0
    %182 = vperm.xlu0 %181, %v172
    %v183 = vpop.permute.xlu0 %182
    %186 = vset.pattern.permute.xlu0 0
    %187 = vperm.xlu0 %186, %v173
    %v188 = vpop.permute.xlu0 %187
    %191 = vset.pattern.permute.xlu0 0
    %192 = vperm.xlu0 %191, %v174
    %v193 = vpop.permute.xlu0 %192
    %vm195 = vcmask 261120
    %v197 = vsel %vm195, %v167, 0
    %v200 = vsel %vm195, %v168, 0
    %v203 = vsel %vm195, %v169, 0
    %v206 = vsel %vm195, %v170, 0
    %208 = vmatprep.subr.mxu0 0.0
    %209 = vmatpush1.msra.mxu0 0.0
    %210 = vmatprep.subr.mxu0 0.0
    %211 = vmatpush1.msra.mxu0 0.0
    %212 = vmatprep.subr.mxu0 0.0
    %213 = vmatpush1.msra.mxu0 0.0
    %214 = vmatprep.subr.mxu0 0.0
    %215 = vmatpush1.msra.mxu0 0.0
    %216 = vmatprep.subr.mxu0 0.0
    %217 = vmatpush1.msra.mxu0 0.0
    %218 = vmatprep.subr.mxu0 0.0
    %219 = vmatpush1.msra.mxu0 0.0
    %220 = vmatprep.subr.mxu0 0.0
    %221 = vmatpush1.msra.mxu0 0.0
    %222 = vmatprep.subr.mxu0 0.0
    %223 = vmatpush1.msra.mxu0 0.0
    %224 = vmatprep.subr.mxu0 0.0
    %225 = vmatpush1.msra.mxu0 0.0
    %226 = vmatprep.subr.mxu0 0.0
    %227 = vmatpush1.msra.mxu0 0.0
    %228 = vmatprep.subr.mxu0 0.0
    %229 = vmatpush1.msra.mxu0 0.0
    %230 = vmatprep.subr.mxu0 0.0
    %231 = vmatpush1.msra.mxu0 0.0
    %232 = vmatprep.subr.mxu0 0.0
    %233 = vmatpush1.msra.mxu0 %v166
    %234 = vmatprep.subr.mxu0 0.0
    %235 = vmatpush1.msra.mxu0 %v165
    %236 = vmatprep.subr.mxu0 0.0
    %237 = vmatpush1.msra.mxu0 %v164
    %238 = vmatprep.subr.mxu0 0.0
    %239 = vmatpush1.msra.mxu0 %v163
    %240 = vmatprep.subr.mxu0 0.0
    %241 = vmatpush2.msra.mxu0 0.0
    %242 = vmatprep.subr.mxu0 0.0
    %243 = vmatpush2.msra.mxu0 0.0
    %244 = vmatprep.subr.mxu0 0.0
    %245 = vmatpush2.msra.mxu0 0.0
    %246 = vmatprep.subr.mxu0 0.0
    %247 = vmatpush2.msra.mxu0 0.0
    %248 = vmatprep.subr.mxu0 0.0
    %249 = vmatpush2.msra.mxu0 0.0
    %250 = vmatprep.subr.mxu0 0.0
    %251 = vmatpush2.msra.mxu0 0.0
    %252 = vmatprep.subr.mxu0 0.0
    %253 = vmatpush2.msra.mxu0 0.0
    %254 = vmatprep.subr.mxu0 0.0
    %255 = vmatpush2.msra.mxu0 0.0
    %256 = vmatprep.subr.mxu0 0.0
    %257 = vmatpush2.msra.mxu0 0.0
    %258 = vmatprep.subr.mxu0 0.0
    %259 = vmatpush2.msra.mxu0 0.0
    %260 = vmatprep.subr.mxu0 0.0
    %261 = vmatpush2.msra.mxu0 0.0
    %262 = vmatprep.subr.mxu0 0.0
    %263 = vmatpush2.msra.mxu0 0.0
    %264 = vmatprep.subr.mxu0 0.0
    %265 = vmatpush2.msra.mxu0 0.0
    %266 = vmatprep.subr.mxu0 0.0
    %267 = vmatpush2.msra.mxu0 0.0
    %268 = vmatprep.subr.mxu0 0.0
    %269 = vmatpush2.msra.mxu0 0.0
    %270 = vmatprep.subr.mxu0 0.0
    %271 = vmatpush2.msra.mxu0 0.0
    %272 = vmatprep.mubr.f32.mxu0 0.0
    %273 = vmatmul.mubr.f32.gmra.mxu0 %v197
    %v274 = vpop.f32.mrf.mxu0
    %v275 = vadd.f32 %v178, %v274
    %v276 = vpop.f32.mrf.mxu0
    %277 = vmatprep.mubr.f32.mxu0 0.0
    %278 = vmatmul.mubr.f32.gmra.mxu0 %v200
    %v279 = vpop.f32.mrf.mxu0
    %v280 = vadd.f32 %v183, %v279
    %v281 = vpop.f32.mrf.mxu0
    %282 = vmatprep.mubr.f32.mxu0 0.0
    %283 = vmatmul.mubr.f32.gmra.mxu0 %v203
    %v284 = vpop.f32.mrf.mxu0
    %v285 = vadd.f32 %v188, %v284
    %v286 = vpop.f32.mrf.mxu0
    %287 = vmatprep.mubr.f32.mxu0 0.0
    %288 = vmatmul.mubr.f32.gmra.mxu0 %v206
    %v289 = vpop.f32.mrf.mxu0
    %v290 = vadd.f32 %v193, %v289
    %v291 = vpop.f32.mrf.mxu0
    %292 = vdwg.mxu0
    %v293 = vmax.f32 %v275, 0.0
    %v294 = vmax.f32 %v280, 0.0
    %v295 = vmax.f32 %v285, 0.0
    %v296 = vmax.f32 %v290, 0.0
    %v297 = vld [vmem:[%s5] sm:$0xf]
    %v298 = vld [vmem:[%s6] sm:$0xf]
    %300 = vset.pattern.permute.xlu0 0
    %301 = vperm.xlu0 %300, %v298
    %v302 = vpop.permute.xlu0 %301
    %v305 = vsel %vm195, %v297, 0
    %307 = vmatprep.subr.mxu0 0.0
    %308 = vmatpush1.msra.mxu0 0.0
    %309 = vmatprep.subr.mxu0 0.0
    %310 = vmatpush1.msra.mxu0 0.0
    %311 = vmatprep.subr.mxu0 0.0
    %312 = vmatpush1.msra.mxu0 0.0
    %313 = vmatprep.subr.mxu0 0.0
    %314 = vmatpush1.msra.mxu0 0.0
    %315 = vmatprep.subr.mxu0 0.0
    %316 = vmatpush1.msra.mxu0 0.0
    %317 = vmatprep.subr.mxu0 0.0
    %318 = vmatpush1.msra.mxu0 0.0
    %319 = vmatprep.subr.mxu0 0.0
    %320 = vmatpush1.msra.mxu0 0.0
    %321 = vmatprep.subr.mxu0 0.0
    %322 = vmatpush1.msra.mxu0 0.0
    %323 = vmatprep.subr.mxu0 0.0
    %324 = vmatpush1.msra.mxu0 0.0
    %325 = vmatprep.subr.mxu0 0.0
    %326 = vmatpush1.msra.mxu0 0.0
    %327 = vmatprep.subr.mxu0 0.0
    %328 = vmatpush1.msra.mxu0 0.0
    %329 = vmatprep.subr.mxu0 0.0
    %330 = vmatpush1.msra.mxu0 0.0
    %331 = vmatprep.subr.mxu0 0.0
    %332 = vmatpush1.msra.mxu0 %v296
    %333 = vmatprep.subr.mxu0 0.0
    %334 = vmatpush1.msra.mxu0 %v295
    %335 = vmatprep.subr.mxu0 0.0
    %336 = vmatpush1.msra.mxu0 %v294
    %337 = vmatprep.subr.mxu0 0.0
    %338 = vmatpush1.msra.mxu0 %v293
    %339 = vmatprep.subr.mxu0 0.0
    %340 = vmatpush2.msra.mxu0 0.0
    %341 = vmatprep.subr.mxu0 0.0
    %342 = vmatpush2.msra.mxu0 0.0
    %343 = vmatprep.subr.mxu0 0.0
    %344 = vmatpush2.msra.mxu0 0.0
    %345 = vmatprep.subr.mxu0 0.0
    %346 = vmatpush2.msra.mxu0 0.0
    %347 = vmatprep.subr.mxu0 0.0
    %348 = vmatpush2.msra.mxu0 0.0
    %349 = vmatprep.subr.mxu0 0.0
    %350 = vmatpush2.msra.mxu0 0.0
    %351 = vmatprep.subr.mxu0 0.0
    %352 = vmatpush2.msra.mxu0 0.0
    %353 = vmatprep.subr.mxu0 0.0
    %354 = vmatpush2.msra.mxu0 0.0
    %355 = vmatprep.subr.mxu0 0.0
    %356 = vmatpush2.msra.mxu0 0.0
    %357 = vmatprep.subr.mxu0 0.0
    %358 = vmatpush2.msra.mxu0 0.0
    %359 = vmatprep.subr.mxu0 0.0
    %360 = vmatpush2.msra.mxu0 0.0
    %361 = vmatprep.subr.mxu0 0.0
    %362 = vmatpush2.msra.mxu0 0.0
    %363 = vmatprep.subr.mxu0 0.0
    %364 = vmatpush2.msra.mxu0 0.0
    %365 = vmatprep.subr.mxu0 0.0
    %366 = vmatpush2.msra.mxu0 0.0
    %367 = vmatprep.subr.mxu0 0.0
    %368 = vmatpush2.msra.mxu0 0.0
    %369 = vmatprep.subr.mxu0 0.0
    %370 = vmatpush2.msra.mxu0 0.0
    %371 = vmatprep.mubr.f32.mxu0 0.0
    %372 = vmatmul.mubr.f32.gmra.mxu0 %v305
    %v373 = vpop.f32.mrf.mxu0
    %v374 = vadd.f32 %v302, %v373
    %v375 = vpop.f32.mrf.mxu0
    %376 = vdwg.mxu0
    %v377 = vtanh.pop %v374
    %v378 = vmul.f32 %v377, 2.0
    %379 = vst [vmem:[#allocation2] sm:$0xf] %v378
    %v380 = vld [vmem:[%s7] sm:$0xf]
    %v381 = vld [vmem:[%s8] sm:$0xf]
    %383 = vset.pattern.permute.xlu0 0
    %384 = vperm.xlu0 %383, %v381
    %v385 = vpop.permute.xlu0 %384
    %v388 = vsel %vm195, %v380, 0
    %390 = vmatprep.subr.mxu0 0.0
    %391 = vmatpush1.msra.mxu0 0.0
    %392 = vmatprep.subr.mxu0 0.0
    %393 = vmatpush1.msra.mxu0 0.0
    %394 = vmatprep.subr.mxu0 0.0
    %395 = vmatpush1.msra.mxu0 0.0
    %396 = vmatprep.subr.mxu0 0.0
    %397 = vmatpush1.msra.mxu0 0.0
    %398 = vmatprep.subr.mxu0 0.0
    %399 = vmatpush1.msra.mxu0 0.0
    %400 = vmatprep.subr.mxu0 0.0
    %401 = vmatpush1.msra.mxu0 0.0
    %402 = vmatprep.subr.mxu0 0.0
    %403 = vmatpush1.msra.mxu0 0.0
    %404 = vmatprep.subr.mxu0 0.0
    %405 = vmatpush1.msra.mxu0 0.0
    %406 = vmatprep.subr.mxu0 0.0
    %407 = vmatpush1.msra.mxu0 0.0
    %408 = vmatprep.subr.mxu0 0.0
    %409 = vmatpush1.msra.mxu0 0.0
    %410 = vmatprep.subr.mxu0 0.0
    %411 = vmatpush1.msra.mxu0 0.0
    %412 = vmatprep.subr.mxu0 0.0
    %413 = vmatpush1.msra.mxu0 0.0
    %414 = vmatprep.subr.mxu0 0.0
    %415 = vmatpush1.msra.mxu0 %v296
    %416 = vmatprep.subr.mxu0 0.0
    %417 = vmatpush1.msra.mxu0 %v295
    %418 = vmatprep.subr.mxu0 0.0
    %419 = vmatpush1.msra.mxu0 %v294
    %420 = vmatprep.subr.mxu0 0.0
    %421 = vmatpush1.msra.mxu0 %v293
    %422 = vmatprep.subr.mxu0 0.0
    %423 = vmatpush2.msra.mxu0 0.0
    %424 = vmatprep.subr.mxu0 0.0
    %425 = vmatpush2.msra.mxu0 0.0
    %426 = vmatprep.subr.mxu0 0.0
    %427 = vmatpush2.msra.mxu0 0.0
    %428 = vmatprep.subr.mxu0 0.0
    %429 = vmatpush2.msra.mxu0 0.0
    %430 = vmatprep.subr.mxu0 0.0
    %431 = vmatpush2.msra.mxu0 0.0
    %432 = vmatprep.subr.mxu0 0.0
    %433 = vmatpush2.msra.mxu0 0.0
    %434 = vmatprep.subr.mxu0 0.0
    %435 = vmatpush2.msra.mxu0 0.0
    %436 = vmatprep.subr.mxu0 0.0
    %437 = vmatpush2.msra.mxu0 0.0
    %438 = vmatprep.subr.mxu0 0.0
    %439 = vmatpush2.msra.mxu0 0.0
    %440 = vmatprep.subr.mxu0 0.0
    %441 = vmatpush2.msra.mxu0 0.0
    %442 = vmatprep.subr.mxu0 0.0
    %443 = vmatpush2.msra.mxu0 0.0
    %444 = vmatprep.subr.mxu0 0.0
    %445 = vmatpush2.msra.mxu0 0.0
    %446 = vmatprep.subr.mxu0 0.0
    %447 = vmatpush2.msra.mxu0 0.0
    %448 = vmatprep.subr.mxu0 0.0
    %449 = vmatpush2.msra.mxu0 0.0
    %450 = vmatprep.subr.mxu0 0.0
    %451 = vmatpush2.msra.mxu0 0.0
    %452 = vmatprep.subr.mxu0 0.0
    %453 = vmatpush2.msra.mxu0 0.0
    %454 = vmatprep.mubr.f32.mxu0 0.0
    %455 = vmatmul.mubr.f32.gmra.mxu0 %v388
    %v456 = vpop.f32.mrf.mxu0
    %v457 = vadd.f32 %v385, %v456
    %v458 = vpop.f32.mrf.mxu0
    %459 = vdwg.mxu0
    %v460 = vmax.f32 %v457, 0.0
    %vm461 = vcmp.ne.f32.partialorder %v457, %v457
    %v462 = vadd.f32 %v457, 0.0
    %v463 = vand.u32 2147483647, %v457
    %v464 = vsub.f32 0.0, %v463
    %v465 = vmul.f32 %v464, 1.442695
    %v466 = vpow.pop %v465
    %v467 = vadd.f32 %v466, 1.0
    %v468 = vlog2.pop %v467
    %v469 = vmul.f32 %v468, 0.6931472
    %v470 = vmul.f32 -0.5, %v466
    %v471 = vadd.f32 %v470, 1.0
    %v472 = vmul.f32 %v471, %v466
    %v473 = vand.u32 2147483647, %v466
    %vm474 = vcmp.lt.f32.partialorder %v473, 0.0004427343
    %v475 = vsel %vm474, %v472, %v469
    %v476 = vadd.f32 %v460, %v475
    %v477 = vsel %vm461, %v462, %v476
    %v478 = vmax.f32 %v477, 1e-06
    %479 = vst [vmem:[#allocation4] sm:$0xf] %v478
    // Predicated region
    $region38: #{tpu_custom_call.1} parent=1 // pred_check
      _
    $region39: #{tpu_custom_call.1} parent=1 // pred_check_branch
      %481 = sbr.rel (0) target = $region41
    $region40: #{tpu_custom_call.1} parent=1 // pred_region
      %s483 = ssub.s32 64, 64
      %484 = vsyncadd [#allocation3], %s483
      %s486 = sshll.u32 [#allocation2], 4
      %s487 = int_to_ptr.vmem [resolvable:$true] %s486
      %489 = dma.vmem_to_hbm [thread:$0]  %s487, 64, %s9, [#allocation3]
    $region41: #{tpu_custom_call.1} parent=1 // pred_fallthru
      _
    // Predicated region
    $region42: #{tpu_custom_call.1} parent=1 // pred_check
      _
    $region43: #{tpu_custom_call.1} parent=1 // pred_check_branch
      %491 = sbr.rel (0) target = $region45
    $region44: #{tpu_custom_call.1} parent=1 // pred_region
      %s493 = ssub.s32 64, 64
      %494 = vsyncadd [#allocation5], %s493
      %s496 = sshll.u32 [#allocation4], 4
      %s497 = int_to_ptr.vmem [resolvable:$true] %s496
      %499 = dma.vmem_to_hbm [thread:$0]  %s497, 64, %s10, [#allocation5]
    $region45: #{tpu_custom_call.1} parent=1 // pred_fallthru
      _
    // Predicated region
    $region46: #{tpu_custom_call.1} parent=1 // pred_check
      _
    $region47: #{tpu_custom_call.1} parent=1 // pred_check_branch
      %501 = sbr.rel (0) target = $region49
    $region48: #{tpu_custom_call.1} parent=1 // pred_region
      %502 = dma.done [#allocation3], 64
    $region49: #{tpu_custom_call.1} parent=1 // pred_fallthru
      _
    // Predicated region
    $region50: #{tpu_custom_call.1} parent=1 // pred_check
      _
    $region51: #{tpu_custom_call.1} parent=1 // pred_check_branch
      %504 = sbr.rel (0) target = $region53
    $region52: #{tpu_custom_call.1} parent=1 // pred_region
      %505 = dma.done [#allocation5], 64
    $region53: #{tpu_custom_call.1} parent=1 // pred_fallthru
      _
    %506 = vsyncpa [#allocation3], 1
    %507 = vsyncpa [#allocation5], 1

</llo_original>
